<compile_context>
chip_gen: v6e
topology: v6e:2x2x1
jax: 0.10.0
libtpu: 0.0.40
codegen_flags: <defaults>
</compile_context>

<pallas_src>
import functools

import jax
import jax.numpy as jnp
from jax import lax
from jax.experimental import pallas as pl
from jax.experimental.pallas import tpu as pltpu


def post_level_attention_kernel(x_ref, w_ref, b_ref, u_ref, out_ref, *,
                                n_valid, compute_dtype):
    # x_ref:   (TB, Np, D) x-dtype   TB batch elements per step, D unpadded
    # w_ref:   (D, Hp)     f32       grid-invariant (resident across steps)
    # b_ref:   (1, Hp)     f32       grid-invariant
    # u_ref:   (1, Hp)     f32       grid-invariant
    # out_ref: (TB, Dp)    f32       lane-dense output slab
    tb, np_, d = x_ref.shape
    hp = w_ref.shape[1]
    dp = out_ref.shape[1]

    x3 = x_ref[...].astype(jnp.float32)                         # (TB, Np, D)

    # One large MXU matmul per grid step: fold (TB, Np) into the M dimension.
    # Np is a multiple of 8, so this reshape is layout-preserving (no copy).
    x2 = x3.reshape(tb * np_, d).astype(compute_dtype)
    w = w_ref[...].astype(compute_dtype)
    h = jnp.tanh(
        jnp.dot(x2, w, preferred_element_type=jnp.float32) + b_ref[...]
    )                                                            # (TB*Np, Hp)

    # Attention score: VPU multiply + XLU lane reduction (no width-1 matmul).
    s = jnp.sum(h.reshape(tb, np_, hp) * u_ref[...], axis=-1)    # (TB, Np)

    # Mask sublane-padded (zero-filled) posts out of the softmax.
    if np_ != n_valid:
        post_idx = lax.broadcasted_iota(jnp.int32, (tb, np_), 1)
        s = jnp.where(post_idx < n_valid, s, -jnp.inf)

    # Max-stabilized softmax over the posts of each batch element.
    m = jnp.max(s, axis=-1, keepdims=True)                       # (TB, 1)
    e = jnp.exp(s - m)                                           # (TB, Np)
    alpha = e / jnp.sum(e, axis=-1, keepdims=True)               # (TB, Np)

    # Weighted pooling over posts, in f32: (TB,Np,1)*(TB,Np,D) -> (TB,D).
    pooled = jnp.sum(alpha[:, :, None] * x3, axis=1)             # (TB, D)

    # Lane-dense store: pad the feature tail so the vst is unmasked.
    if dp != d:
        pooled = jnp.concatenate(
            [pooled, jnp.zeros((tb, dp - d), pooled.dtype)], axis=-1)
    out_ref[...] = pooled


def lrp_post_level_attention(x, w, b, u, *, tb=None,
                             compute_dtype=jnp.float32, x_hbm_dtype=None):
    """x: (B, N, D); w: (D, H); b: (H,); u: (H,).  Returns (B, D) f32.

    compute_dtype: matmul operand dtype only (accumulation stays f32).
    x_hbm_dtype:   optional narrower HBM storage dtype for x (e.g. bfloat16 on
      v6e/v7x halves the dominant HBM read; upcast to f32 happens in VMEM).
      Default keeps f32 for bit-accuracy vs the f32 reference.
    tb:            batch elements per grid step; must be a multiple of 8
      (or equal B when it becomes the single full-batch block).
    """
    B, N, D = x.shape
    H = w.shape[1]
    LANE, SUB = 128, 8

    # Lane-pad only the tiny, grid-invariant operands (W, b, u) and the output
    # slab.  Zero padding is semantics-preserving: padded H columns contribute
    # tanh(0)*0 = 0 to the score; padded output lanes are sliced away below.
    hp = -(-H // LANE) * LANE
    dp = -(-D // LANE) * LANE
    wp = jnp.pad(w.astype(jnp.float32), ((0, 0), (0, hp - H)))
    bias_p = jnp.pad(b.astype(jnp.float32), (0, hp - H)).reshape(1, hp)
    u_p = jnp.pad(u.astype(jnp.float32), (0, hp - H)).reshape(1, hp)

    # x stays UNPADDED in the feature (lane) dim -- it is the dominant HBM
    # traffic.  Only the post dim is padded to a sublane multiple so in-kernel
    # reshapes are free; padded posts are masked out of the softmax in-kernel.
    np_ = -(-N // SUB) * SUB
    xp = x.astype(jnp.float32)
    if np_ != N:
        xp = jnp.pad(xp, ((0, 0), (0, np_ - N), (0, 0)))
    if x_hbm_dtype is not None:
        xp = xp.astype(x_hbm_dtype)
    itemsize = jnp.dtype(xp.dtype).itemsize
    x_bytes_per_be = np_ * D * itemsize

    # Per-batch-element VMEM working set: double-buffered x tile + f32 copy of
    # the tile + h + alpha*x product + double-buffered output slab (f32).
    vmem_per_be = (2 * np_ * D * itemsize + np_ * D * 4 + np_ * hp * 4
                   + np_ * D * 4 + 2 * dp * 4)
    VMEM_BUDGET = 40 << 20          # stay well inside v7x's 64 MiB VMEM / core

    if tb is None:
        if B <= SUB:
            tb = B                                    # single full-batch block
        else:
            tb = (2 << 20) // max(x_bytes_per_be, 1)      # ~2 MiB x tile/step
            min_steps = 4 if B >= 64 else 2               # >=2 steps (v7x TCs)
            tb = min(tb, B // min_steps)
            tb = min(tb, VMEM_BUDGET // max(vmem_per_be, 1))
            tb = max(SUB, (tb // SUB) * SUB)              # round DOWN: never
                                                          # collapse the grid
    b_padded = -(-B // tb) * tb
    if b_padded != B:
        # Zero-padded batch rows produce finite, all-zero outputs (sliced off).
        xp = jnp.pad(xp, ((0, b_padded - B), (0, 0), (0, 0)))

    vmem_needed = tb * vmem_per_be + (D * hp + 2 * hp) * 4 + (1 << 20)
    vmem_limit = int(min(48 << 20, max(32 << 20, (vmem_needed * 3) // 2)))

    kernel = functools.partial(post_level_attention_kernel,
                               n_valid=N, compute_dtype=compute_dtype)

    out = pl.pallas_call(
        kernel,
        out_shape=jax.ShapeDtypeStruct((b_padded, dp), jnp.float32),
        grid_spec=pltpu.PrefetchScalarGridSpec(
            num_scalar_prefetch=0,
            grid=(b_padded // tb,),
            in_specs=[
                # x: unpadded feature dim (full-dim block is legal), full posts.
                pl.BlockSpec((tb, np_, D), lambda i: (i, 0, 0)),
                # Grid-invariant operands: constant index maps -> fetched once,
                # resident across grid steps.
                pl.BlockSpec((D, hp), lambda i: (0, 0)),
                pl.BlockSpec((1, hp), lambda i: (0, 0)),
                pl.BlockSpec((1, hp), lambda i: (0, 0)),
            ],
            out_specs=pl.BlockSpec((tb, dp), lambda i: (i, 0)),
        ),
        compiler_params=pltpu.CompilerParams(
            dimension_semantics=("parallel",),
            vmem_limit_bytes=vmem_limit,
        ),
    )(xp, wp, bias_p, u_p)
    return out[:B, :D]


def reference(x, w, b, u):
    h = jnp.tanh(jnp.einsum("bnd,dh->bnh", x, w) + b[None, None, :])
    s = jnp.einsum("bnh,h->bn", h, u)
    alpha = jax.nn.softmax(s, axis=1)
    return jnp.einsum("bn,bnd->bd", alpha, x)


if __name__ == "__main__":
    B, N, D, H = 16, 8, 32, 32  # batch, num_posts, feature dim, attn hidden dim

    key = jax.random.PRNGKey(0)
    kx, kw, kb, ku = jax.random.split(key, 4)
    x = jax.random.normal(kx, (B, N, D), dtype=jnp.float32)
    # deterministic parameter init (Linear(D->H) weight^T, bias, context vec u)
    w = jax.random.normal(kw, (D, H), dtype=jnp.float32) * (1.0 / jnp.sqrt(D))
    b = jax.random.normal(kb, (H,), dtype=jnp.float32) * 0.01
    u = jax.random.normal(ku, (H,), dtype=jnp.float32) * (1.0 / jnp.sqrt(H))

    out = lrp_post_level_attention(x, w, b, u)
    out = jax.block_until_ready(out)

    ref = reference(x, w, b, u)
    assert out.shape == (B, D)
    assert jnp.allclose(out, ref, atol=5e-3, rtol=5e-3), "mismatch vs reference"
    print("KERNEL_OK")
</pallas_src>

<mosaic_0001>
module attributes {stable_mosaic.version = 11 : i64} {
  func.func @post_level_attention_kernel(%arg0: i32, %arg1: memref<8x8x32xf32, #tpu.memory_space<vmem>>, %arg2: memref<32x128xf32, #tpu.memory_space<vmem>>, %arg3: memref<1x128xf32, #tpu.memory_space<vmem>>, %arg4: memref<1x128xf32, #tpu.memory_space<vmem>>, %arg5: memref<8x128xf32, #tpu.memory_space<vmem>>) attributes {dimension_semantics = [#tpu.dimension_semantics<parallel>], iteration_bounds = array<i64: 2>, scalar_prefetch = 0 : i64, scratch_operands = 0 : i64, tpu.core_type = #tpu.core_type<tc>, window_params = [{transform_indices = @transform_0, window_bounds = array<i64: 8, 8, 32>}, {pipeline_mode = #tpu.pipeline_mode<synchronous>, transform_indices = @transform_1, window_bounds = array<i64: 32, 128>}, {pipeline_mode = #tpu.pipeline_mode<synchronous>, transform_indices = @transform_2, window_bounds = array<i64: 1, 128>}, {pipeline_mode = #tpu.pipeline_mode<synchronous>, transform_indices = @transform_3, window_bounds = array<i64: 1, 128>}, {transform_indices = @transform_4, window_bounds = array<i64: 8, 128>}]} {
    %c0 = arith.constant 0 : index
    %c0_0 = arith.constant 0 : index
    %c0_1 = arith.constant 0 : index
    %0 = vector.load %arg1[%c0, %c0_0, %c0_1] : memref<8x8x32xf32, #tpu.memory_space<vmem>>, vector<8x8x32xf32>
    %1 = vector.shape_cast %0 : vector<8x8x32xf32> to vector<64x32xf32>
    %c0_2 = arith.constant 0 : index
    %c0_3 = arith.constant 0 : index
    %2 = vector.load %arg2[%c0_2, %c0_3] : memref<32x128xf32, #tpu.memory_space<vmem>>, vector<32x128xf32>
    %cst = arith.constant dense<0.000000e+00> : vector<64x128xf32>
    %3 = tpu.matmul %1, %2, %cst {dimension_numbers = #tpu.dot_dimension_numbers<[1], [0], [0], [1], [0, 0, 1, 1], [], []>} : vector<64x32xf32>, vector<32x128xf32>, vector<64x128xf32> -> vector<64x128xf32>
    %c0_4 = arith.constant 0 : index
    %c0_5 = arith.constant 0 : index
    %4 = vector.load %arg3[%c0_4, %c0_5] : memref<1x128xf32, #tpu.memory_space<vmem>>, vector<1x128xf32>
    %5 = vector.broadcast %4 : vector<1x128xf32> to vector<64x128xf32>
    %6 = arith.addf %3, %5 : vector<64x128xf32>
    %7 = math.tanh %6 : vector<64x128xf32>
    %8 = vector.shape_cast %7 : vector<64x128xf32> to vector<8x8x128xf32>
    %c0_6 = arith.constant 0 : index
    %c0_7 = arith.constant 0 : index
    %9 = vector.load %arg4[%c0_6, %c0_7] : memref<1x128xf32, #tpu.memory_space<vmem>>, vector<1x128xf32>
    %10 = vector.shape_cast %9 : vector<1x128xf32> to vector<1x1x128xf32>
    %11 = vector.broadcast %10 : vector<1x1x128xf32> to vector<8x8x128xf32>
    %12 = arith.mulf %8, %11 : vector<8x8x128xf32>
    %cst_8 = arith.constant dense<0.000000e+00> : vector<8x8xf32>
    %13 = vector.multi_reduction <add>, %12, %cst_8 [2] : vector<8x8x128xf32> to vector<8x8xf32>
    %cst_9 = arith.constant dense<0xFF800000> : vector<8xf32>
    %14 = vector.multi_reduction <maximumf>, %13, %cst_9 [1] : vector<8x8xf32> to vector<8xf32>
    %15 = vector.shape_cast %14 : vector<8xf32> to vector<8x1xf32>
    %16 = vector.broadcast %15 : vector<8x1xf32> to vector<8x8xf32>
    %17 = arith.subf %13, %16 : vector<8x8xf32>
    %18 = math.exp %17 : vector<8x8xf32>
    %cst_10 = arith.constant dense<0.000000e+00> : vector<8xf32>
    %19 = vector.multi_reduction <add>, %18, %cst_10 [1] : vector<8x8xf32> to vector<8xf32>
    %20 = vector.shape_cast %19 : vector<8xf32> to vector<8x1xf32>
    %21 = vector.broadcast %20 : vector<8x1xf32> to vector<8x8xf32>
    %22 = arith.divf %18, %21 : vector<8x8xf32>
    %23 = vector.shape_cast %22 : vector<8x8xf32> to vector<8x8x1xf32>
    %24 = vector.broadcast %23 : vector<8x8x1xf32> to vector<8x8x32xf32>
    %25 = arith.mulf %24, %0 : vector<8x8x32xf32>
    %cst_11 = arith.constant dense<0.000000e+00> : vector<8x32xf32>
    %26 = vector.multi_reduction <add>, %25, %cst_11 [1] : vector<8x8x32xf32> to vector<8x32xf32>
    %cst_12 = arith.constant 0.000000e+00 : f32
    %27 = vector.broadcast %cst_12 : f32 to vector<8x96xf32>
    %28 = tpu.concatenate %26, %27 in 1 : vector<8x32xf32>, vector<8x96xf32> -> vector<8x128xf32>
    %c0_13 = arith.constant 0 : index
    %c0_14 = arith.constant 0 : index
    %29 = vector.load %arg5[%c0_13, %c0_14] : memref<8x128xf32, #tpu.memory_space<vmem>>, vector<8x128xf32>
    tpu.vector_store %arg5[%c0_13, %c0_14], %28 {strides = array<i32>} : memref<8x128xf32, #tpu.memory_space<vmem>>, vector<8x128xf32>,
    return
  }
  func.func @transform_0(%arg0: i32) -> (i32, i32, i32) {
    %c0_i32 = arith.constant 0 : i32
    %c0_i32_0 = arith.constant 0 : i32
    %c0_i32_1 = arith.constant 0 : i32
    return %arg0, %c0_i32, %c0_i32_0 : i32, i32, i32
  }
  func.func @transform_1(%arg0: i32) -> (i32, i32) {
    %c0_i32 = arith.constant 0 : i32
    %c0_i32_0 = arith.constant 0 : i32
    %c0_i32_1 = arith.constant 0 : i32
    return %c0_i32, %c0_i32_0 : i32, i32
  }
  func.func @transform_2(%arg0: i32) -> (i32, i32) {
    %c0_i32 = arith.constant 0 : i32
    %c0_i32_0 = arith.constant 0 : i32
    %c0_i32_1 = arith.constant 0 : i32
    return %c0_i32, %c0_i32_0 : i32, i32
  }
  func.func @transform_3(%arg0: i32) -> (i32, i32) {
    %c0_i32 = arith.constant 0 : i32
    %c0_i32_0 = arith.constant 0 : i32
    %c0_i32_1 = arith.constant 0 : i32
    return %c0_i32, %c0_i32_0 : i32, i32
  }
  func.func @transform_4(%arg0: i32) -> (i32, i32) {
    %c0_i32 = arith.constant 0 : i32
    %c0_i32_0 = arith.constant 0 : i32
    return %arg0, %c0_i32 : i32, i32
  }
}

</mosaic_0001>

<llo_original>
// kernel: tpu_custom_call.1
$region0: #{tpu_custom_call.1}
  #allocation0 [shape = 'u32[]', space=smem, size = 0x4, offset = 0x4, fixed_abs, tag = 'smem constant byte address 0x4 - core index']
  #allocation1 [shape = 'u32[144,128]{1,0:T(1,128)}', space=vmem, size = 0x12000, scoped, tag = 'internal scratch']
  %s0 = inlined_call_operand.hbm [shape: f32[16,8,32], index: 0, kind: input, shape index: {}]
  %s1 = inlined_call_operand.hbm [shape: f32[32,128], index: 1, kind: input, shape index: {}]
  %s2 = inlined_call_operand.vmem [shape: f32[1,128], index: 2, kind: input, shape index: {}]
  %s3 = inlined_call_operand.vmem [shape: f32[1,128], index: 3, kind: input, shape index: {}]
  %s4 = inlined_call_operand.hbm [shape: f32[16,128], index: 4, kind: output, shape index: {}]
  %s5 = sld [smem:[#allocation0]]
  $region57: #{tpu_custom_call.1} parent=0
    _
  %s7 = ssub.s32 1, %s5
  %s8 = scalar_select 0, %s7, %s5
  $region1: #{tpu_custom_call.1} parent=0
    #allocation2 [shape = 'u8[65536]{0}', space=vmem, size = 0x10000, scoped, tag = 'input window, operand 0']
    #allocation3 [shape = 's32[2]{0}', space=sflag, size = 0x8, scoped, tag = 'scoped memory for tpu_custom_call.1']
    #allocation4 [shape = 's32[2]{0}', space=sflag, size = 0x8, scoped, tag = 'scoped memory for tpu_custom_call.1']
    #allocation5 [shape = 'u8[16384]{0}', space=vmem, size = 0x4000, scoped, tag = 'input window, operand 1, single buffered']
    #allocation6 [shape = 's32[1]{0}', space=sflag, size = 0x4, scoped, tag = 'scoped memory for tpu_custom_call.1']
    #allocation7 [shape = 'u8[8192]{0}', space=vmem, size = 0x2000, scoped, tag = 'output window, operand 0']
    %9 = vsyncpa [#allocation3], 0
    %s10 = scalar_lea.sflag [#allocation3], 1
    %11 = vsyncpa %s10, 0
    %12 = vsyncpa [#allocation6], 0
    %13 = vsyncpa [#allocation4], 0
    %s14 = scalar_lea.sflag [#allocation4], 1
    %15 = vsyncpa %s14, 0
    loop: start=0, step=1, limit=4
    $region2: #{tpu_custom_call.1} parent=1 // loop_pre_header
      _
    $region3: #{tpu_custom_call.1} parent=1 // loop_header
      %s17 = sphi 0, %s21
      %p18 = scmp.ge.s32.totalorder %s17, 4
      %s27 = sphi 0, %s29
      %s30 = sphi 0, %s27
      %s31 = sphi 0, %s30
      %s47 = sphi 0, %s31
      %s51 = sphi 0, %s51
      %s53 = sphi 0, %s51
      %s54 = sphi 0, %s53
      %s68 = sphi 0, %s54
      %s72 = sphi 0, %s72
      %s74 = sphi 0, %s72
      %s75 = sphi 0, %s74
      %s89 = sphi 0, %s75
      %s93 = sphi 0, %s93
      %s95 = sphi 0, %s93
      %s96 = sphi 0, %s95
      %s110 = sphi 0, %s96
      %s116 = sphi 0, %s118
      %s119 = sphi 0, %s116
      %s120 = sphi 0, %s119
      %s136 = sphi 0, %s120
    $region4: #{tpu_custom_call.1} parent=1 // loop_header_branch
      %20 = sbr.rel (%p18) target = $region8
    $region5: #{tpu_custom_call.1} parent=1 // loop_body
      %s22 = ssub.s32 %s17, 1
      %s23 = ssub.s32 %s17, 2
      %s24 = sadd.s32 %s17, 1
      %s25 = ssub.s32 %s17, %s24
      %p26 = scmp.eq.s32.totalorder %s25, 0
      %s28 = sadd.s32 %s27, 1
      %s29 = scalar_select %p26, %s27, %s28
      %p32 = pneg %p26
      %p33 = scmp.eq.s32.totalorder %s17, 1
      %p34 = por %p32, %p33
      %p35 = scmp.ne.s32.totalorder %s27, %s30
      %p36 = scmp.eq.s32.totalorder %s17, 0
      %p37 = por %p35, %p36
      %p38 = scmp.ne.s32.totalorder %s27, %s30
      %p39 = scmp.eq.s32.totalorder %s22, 1
      %p40 = por %p38, %p39
      %p41 = scmp.ne.s32.totalorder %s30, %s31
      %p42 = scmp.eq.s32.totalorder %s22, 0
      %p43 = por %p41, %p42
      %p44 = scmp.ne.s32.totalorder %s30, %s31
      %p45 = scmp.eq.s32.totalorder %s23, 1
      %p46 = por %p44, %p45
      %p48 = scmp.ne.s32.totalorder %s31, %s47
      %p49 = scmp.eq.s32.totalorder %s23, 0
      %p50 = por %p48, %p49
      %s52 = sadd.s32 %s51, 1
      %p55 = scmp.eq.s32.totalorder %s17, 1
      %p56 = scmp.ne.s32.totalorder %s51, %s53
      %p57 = scmp.eq.s32.totalorder %s17, 0
      %p58 = por %p56, %p57
      %p59 = scmp.ne.s32.totalorder %s51, %s53
      %p60 = scmp.eq.s32.totalorder %s22, 1
      %p61 = por %p59, %p60
      %p62 = scmp.ne.s32.totalorder %s53, %s54
      %p63 = scmp.eq.s32.totalorder %s22, 0
      %p64 = por %p62, %p63
      %p65 = scmp.ne.s32.totalorder %s53, %s54
      %p66 = scmp.eq.s32.totalorder %s23, 1
      %p67 = por %p65, %p66
      %p69 = scmp.ne.s32.totalorder %s54, %s68
      %p70 = scmp.eq.s32.totalorder %s23, 0
      %p71 = por %p69, %p70
      %s73 = sadd.s32 %s72, 1
      %p76 = scmp.eq.s32.totalorder %s17, 1
      %p77 = scmp.ne.s32.totalorder %s72, %s74
      %p78 = scmp.eq.s32.totalorder %s17, 0
      %p79 = por %p77, %p78
      %p80 = scmp.ne.s32.totalorder %s72, %s74
      %p81 = scmp.eq.s32.totalorder %s22, 1
      %p82 = por %p80, %p81
      %p83 = scmp.ne.s32.totalorder %s74, %s75
      %p84 = scmp.eq.s32.totalorder %s22, 0
      %p85 = por %p83, %p84
      %p86 = scmp.ne.s32.totalorder %s74, %s75
      %p87 = scmp.eq.s32.totalorder %s23, 1
      %p88 = por %p86, %p87
      %p90 = scmp.ne.s32.totalorder %s75, %s89
      %p91 = scmp.eq.s32.totalorder %s23, 0
      %p92 = por %p90, %p91
      %s94 = sadd.s32 %s93, 1
      %p97 = scmp.eq.s32.totalorder %s17, 1
      %p98 = scmp.ne.s32.totalorder %s93, %s95
      %p99 = scmp.eq.s32.totalorder %s17, 0
      %p100 = por %p98, %p99
      %p101 = scmp.ne.s32.totalorder %s93, %s95
      %p102 = scmp.eq.s32.totalorder %s22, 1
      %p103 = por %p101, %p102
      %p104 = scmp.ne.s32.totalorder %s95, %s96
      %p105 = scmp.eq.s32.totalorder %s22, 0
      %p106 = por %p104, %p105
      %p107 = scmp.ne.s32.totalorder %s95, %s96
      %p108 = scmp.eq.s32.totalorder %s23, 1
      %p109 = por %p107, %p108
      %p111 = scmp.ne.s32.totalorder %s96, %s110
      %p112 = scmp.eq.s32.totalorder %s23, 0
      %p113 = por %p111, %p112
      %s114 = ssub.s32 %s17, %s24
      %p115 = scmp.eq.s32.totalorder %s114, 0
      %s117 = sadd.s32 %s116, 1
      %s118 = scalar_select %p115, %s116, %s117
      %p121 = pneg %p115
      %p122 = scmp.eq.s32.totalorder %s17, 1
      %p123 = por %p121, %p122
      %p124 = scmp.ne.s32.totalorder %s116, %s119
      %p125 = scmp.eq.s32.totalorder %s17, 0
      %p126 = por %p124, %p125
      %p127 = scmp.ne.s32.totalorder %s116, %s119
      %p128 = scmp.eq.s32.totalorder %s22, 1
      %p129 = por %p127, %p128
      %p130 = scmp.ne.s32.totalorder %s119, %s120
      %p131 = scmp.eq.s32.totalorder %s22, 0
      %p132 = por %p130, %p131
      %p133 = scmp.ne.s32.totalorder %s119, %s120
      %p134 = scmp.eq.s32.totalorder %s23, 1
      %p135 = por %p133, %p134
      %p137 = scmp.ne.s32.totalorder %s120, %s136
      %p138 = scmp.eq.s32.totalorder %s23, 0
      %p139 = por %p137, %p138
      %p140 = scmp.le.s32.totalorder 1, %s17
      %p141 = scmp.lt.s32.totalorder %s17, 3
      %p142 = pnand %p140, %p141
      %p143 = pneg %p142
      // Predicated region
      $region9: #{tpu_custom_call.1} parent=5 // pred_check
        _
      $region10: #{tpu_custom_call.1} parent=5 // pred_check_branch
        %145 = sbr.rel (%p142) target = $region12
      $region11: #{tpu_custom_call.1} parent=5 // pred_region
        %s146 = ssub.s32 %s17, 1
        // Predicated region
        $region13: #{tpu_custom_call.1} parent=11 // pred_check
          %p147 = pneg %p64
        $region14: #{tpu_custom_call.1} parent=11 // pred_check_branch
          %149 = sbr.rel (%p147) target = $region16
        $region15: #{tpu_custom_call.1} parent=11 // pred_region
          %s151 = ssub.s32 512, 512
          %152 = vsyncadd [#allocation6], %s151
          %s153 = sshll.u32 [#allocation5], 4
          %s154 = int_to_ptr.vmem [resolvable:$true] %s153
          %159 = dma.hbm_to_vmem [thread:$0]  %s1, 512, %s154, [#allocation6], 128, 128, 8
        $region16: #{tpu_custom_call.1} parent=11 // pred_fallthru
          _
        // Predicated region
        $region17: #{tpu_custom_call.1} parent=11 // pred_check
          %p160 = pneg %p85
        $region18: #{tpu_custom_call.1} parent=11 // pred_check_branch
          %162 = sbr.rel (%p160) target = $region20
        $region19: #{tpu_custom_call.1} parent=11 // pred_region
          _
        $region20: #{tpu_custom_call.1} parent=11 // pred_fallthru
          _
        // Predicated region
        $region21: #{tpu_custom_call.1} parent=11 // pred_check
          %p163 = pneg %p106
        $region22: #{tpu_custom_call.1} parent=11 // pred_check_branch
          %165 = sbr.rel (%p163) target = $region24
        $region23: #{tpu_custom_call.1} parent=11 // pred_region
          _
        $region24: #{tpu_custom_call.1} parent=11 // pred_fallthru
          _
      $region12: #{tpu_custom_call.1} parent=5 // pred_fallthru
        _
      %p166 = scmp.lt.s32.totalorder %s17, 2
      // Predicated region
      $region25: #{tpu_custom_call.1} parent=5 // pred_check
        %p167 = pneg %p166
      $region26: #{tpu_custom_call.1} parent=5 // pred_check_branch
        %169 = sbr.rel (%p167) target = $region28
      $region27: #{tpu_custom_call.1} parent=5 // pred_region
        // Predicated region
        $region29: #{tpu_custom_call.1} parent=27 // pred_check
          %p170 = pneg %p37
        $region30: #{tpu_custom_call.1} parent=27 // pred_check_branch
          %172 = sbr.rel (%p170) target = $region32
        $region31: #{tpu_custom_call.1} parent=27 // pred_region
          %s173 = sand.u32 %s27, 1
          %s174 = scalar_lea.sflag [#allocation3], %s173
          %s175 = sand.u32 %s27, 1
          %s176 = smul.addr %s175, 64
          %s177 = scalar_lea.vmem [#allocation2], %s176
          %s178 = smul.u32 8, %s17
          %s180 = ssub.s32 1024, 1024
          %181 = vsyncadd %s174, %s180
          %s182 = smul.addr %s178, 128
          %s183 = scalar_lea.hbm %s0, %s182
          %s184 = sshll.u32 %s177, 4
          %s185 = int_to_ptr.vmem [resolvable:$true] %s184
          %190 = dma.hbm_to_vmem [thread:$0]  %s183, 1024, %s185, %s174, 128, 128, 8
        $region32: #{tpu_custom_call.1} parent=27 // pred_fallthru
          _
      $region28: #{tpu_custom_call.1} parent=5 // pred_fallthru
        _
      %p191 = scmp.le.s32.totalorder 1, %s17
      %p192 = scmp.lt.s32.totalorder %s17, 3
      %p193 = pnand %p191, %p192
      %p194 = pneg %p193
      // Predicated region
      $region33: #{tpu_custom_call.1} parent=5 // pred_check
        _
      $region34: #{tpu_custom_call.1} parent=5 // pred_check_branch
        %196 = sbr.rel (%p193) target = $region36
      $region35: #{tpu_custom_call.1} parent=5 // pred_region
        %s197 = ssub.s32 %s17, 1
        %s198 = sand.u32 %s30, 1
        %s199 = scalar_lea.sflag [#allocation3], %s198
        %s200 = sand.u32 %s30, 1
        %s201 = smul.addr %s200, 64
        %s202 = scalar_lea.vmem [#allocation2], %s201
        // Predicated region
        $region37: #{tpu_custom_call.1} parent=35 // pred_check
          %p203 = pneg %p43
        $region38: #{tpu_custom_call.1} parent=35 // pred_check_branch
          %205 = sbr.rel (%p203) target = $region40
        $region39: #{tpu_custom_call.1} parent=35 // pred_region
          %206 = dma.done %s199, 1024
        $region40: #{tpu_custom_call.1} parent=35 // pred_fallthru
          _
        // Predicated region
        $region41: #{tpu_custom_call.1} parent=35 // pred_check
          %p207 = pneg %p64
        $region42: #{tpu_custom_call.1} parent=35 // pred_check_branch
          %209 = sbr.rel (%p207) target = $region44
        $region43: #{tpu_custom_call.1} parent=35 // pred_region
          %210 = dma.done [#allocation6], 512
        $region44: #{tpu_custom_call.1} parent=35 // pred_fallthru
          _
        %s211 = sand.u32 %s30, 1
        %s212 = scalar_lea.sflag [#allocation3], %s211
        %s213 = sand.u32 %s30, 1
        %s214 = smul.addr %s213, 64
        %s215 = scalar_lea.vmem [#allocation2], %s214
        %p216 = pneg %p43
        %p217 = pneg %p40
        %p218 = pneg %p64
        %p219 = pneg %p61
        %p220 = pneg %p85
        %p221 = pneg %p82
        %p222 = pneg %p106
        %p223 = pneg %p103
        %p224 = pneg %p132
        %p225 = pneg %p129
        %s226 = sand.u32 %s119, 1
        %s227 = scalar_lea.sflag [#allocation4], %s226
        %s228 = sand.u32 %s119, 1
        %s229 = smul.addr %s228, 8
        %s230 = scalar_lea.vmem [#allocation7], %s229
        %s231 = smul.u32 8, %s22
        %v232 = vld [vmem:[%s202] sm:$0xff]
        %v233 = vld [vmem:[%s202 + $0x8] sm:$0xff]
        %v234 = vld [vmem:[%s202 + $0x10] sm:$0xff]
        %v235 = vld [vmem:[%s202 + $0x18] sm:$0xff]
        %v236 = vld [vmem:[%s202 + $0x20] sm:$0xff]
        %v237 = vld [vmem:[%s202 + $0x28] sm:$0xff]
        %v238 = vld [vmem:[%s202 + $0x30] sm:$0xff]
        %v239 = vld [vmem:[%s202 + $0x38] sm:$0xff]
        %v240 = vld [vmem:[#allocation5] sm:$0xff]
        %v241 = vld [vmem:[#allocation5 + $0x8] sm:$0xff]
        %v242 = vld [vmem:[#allocation5 + $0x10] sm:$0xff]
        %v243 = vld [vmem:[#allocation5 + $0x18] sm:$0xff]
        %v244 = vld [vmem:[%s2] sm:$0x1]
        %v246 = vlaneseq
        %v247 = vshrl.u32 %v246, 7
        %v248 = vsub.s32 0, %v247
        %v249 = vrot.slane %v244, %v248
        %vm251 = vcmask 261120
        %v253 = vsel %vm251, %v232, 0
        %v256 = vsel %vm251, %v233, 0
        %v259 = vsel %vm251, %v234, 0
        %v262 = vsel %vm251, %v235, 0
        %v265 = vsel %vm251, %v236, 0
        %v268 = vsel %vm251, %v237, 0
        %v271 = vsel %vm251, %v238, 0
        %v274 = vsel %vm251, %v239, 0
        %276 = vmatprep.subr.mxu0 0.0
        %277 = vmatpush1.msra.mxu0 0.0
        %278 = vmatprep.subr.mxu0 0.0
        %279 = vmatpush1.msra.mxu0 0.0
        %280 = vmatprep.subr.mxu0 0.0
        %281 = vmatpush1.msra.mxu0 0.0
        %282 = vmatprep.subr.mxu0 0.0
        %283 = vmatpush1.msra.mxu0 0.0
        %284 = vmatprep.subr.mxu0 0.0
        %285 = vmatpush1.msra.mxu0 0.0
        %286 = vmatprep.subr.mxu0 0.0
        %287 = vmatpush1.msra.mxu0 0.0
        %288 = vmatprep.subr.mxu0 0.0
        %289 = vmatpush1.msra.mxu0 0.0
        %290 = vmatprep.subr.mxu0 0.0
        %291 = vmatpush1.msra.mxu0 0.0
        %292 = vmatprep.subr.mxu0 0.0
        %293 = vmatpush1.msra.mxu0 0.0
        %294 = vmatprep.subr.mxu0 0.0
        %295 = vmatpush1.msra.mxu0 0.0
        %296 = vmatprep.subr.mxu0 0.0
        %297 = vmatpush1.msra.mxu0 0.0
        %298 = vmatprep.subr.mxu0 0.0
        %299 = vmatpush1.msra.mxu0 0.0
        %300 = vmatprep.subr.mxu0 0.0
        %301 = vmatpush1.msra.mxu0 %v243
        %302 = vmatprep.subr.mxu0 0.0
        %303 = vmatpush1.msra.mxu0 %v242
        %304 = vmatprep.subr.mxu0 0.0
        %305 = vmatpush1.msra.mxu0 %v241
        %306 = vmatprep.subr.mxu0 0.0
        %307 = vmatpush1.msra.mxu0 %v240
        %308 = vmatprep.subr.mxu0 0.0
        %309 = vmatpush2.msra.mxu0 0.0
        %310 = vmatprep.subr.mxu0 0.0
        %311 = vmatpush2.msra.mxu0 0.0
        %312 = vmatprep.subr.mxu0 0.0
        %313 = vmatpush2.msra.mxu0 0.0
        %314 = vmatprep.subr.mxu0 0.0
        %315 = vmatpush2.msra.mxu0 0.0
        %316 = vmatprep.subr.mxu0 0.0
        %317 = vmatpush2.msra.mxu0 0.0
        %318 = vmatprep.subr.mxu0 0.0
        %319 = vmatpush2.msra.mxu0 0.0
        %320 = vmatprep.subr.mxu0 0.0
        %321 = vmatpush2.msra.mxu0 0.0
        %322 = vmatprep.subr.mxu0 0.0
        %323 = vmatpush2.msra.mxu0 0.0
        %324 = vmatprep.subr.mxu0 0.0
        %325 = vmatpush2.msra.mxu0 0.0
        %326 = vmatprep.subr.mxu0 0.0
        %327 = vmatpush2.msra.mxu0 0.0
        %328 = vmatprep.subr.mxu0 0.0
        %329 = vmatpush2.msra.mxu0 0.0
        %330 = vmatprep.subr.mxu0 0.0
        %331 = vmatpush2.msra.mxu0 0.0
        %332 = vmatprep.subr.mxu0 0.0
        %333 = vmatpush2.msra.mxu0 0.0
        %334 = vmatprep.subr.mxu0 0.0
        %335 = vmatpush2.msra.mxu0 0.0
        %336 = vmatprep.subr.mxu0 0.0
        %337 = vmatpush2.msra.mxu0 0.0
        %338 = vmatprep.subr.mxu0 0.0
        %339 = vmatpush2.msra.mxu0 0.0
        %340 = vmatprep.mubr.f32.mxu0 0.0
        %341 = vmatmul.mubr.f32.gmra.mxu0 %v253
        %v342 = vpop.f32.mrf.mxu0
        %v343 = vadd.f32 %v249, %v342
        %v344 = vpop.f32.mrf.mxu0
        %345 = vmatprep.mubr.f32.mxu0 0.0
        %346 = vmatmul.mubr.f32.gmra.mxu0 %v256
        %v347 = vpop.f32.mrf.mxu0
        %v348 = vadd.f32 %v249, %v347
        %v349 = vpop.f32.mrf.mxu0
        %350 = vmatprep.mubr.f32.mxu0 0.0
        %351 = vmatmul.mubr.f32.gmra.mxu0 %v259
        %v352 = vpop.f32.mrf.mxu0
        %v353 = vadd.f32 %v249, %v352
        %v354 = vpop.f32.mrf.mxu0
        %355 = vmatprep.mubr.f32.mxu0 0.0
        %356 = vmatmul.mubr.f32.gmra.mxu0 %v262
        %v357 = vpop.f32.mrf.mxu0
        %v358 = vadd.f32 %v249, %v357
        %v359 = vpop.f32.mrf.mxu0
        %360 = vmatprep.mubr.f32.mxu0 0.0
        %361 = vmatmul.mubr.f32.gmra.mxu0 %v265
        %v362 = vpop.f32.mrf.mxu0
        %v363 = vadd.f32 %v249, %v362
        %v364 = vpop.f32.mrf.mxu0
        %365 = vmatprep.mubr.f32.mxu0 0.0
        %366 = vmatmul.mubr.f32.gmra.mxu0 %v268
        %v367 = vpop.f32.mrf.mxu0
        %v368 = vadd.f32 %v249, %v367
        %v369 = vpop.f32.mrf.mxu0
        %370 = vmatprep.mubr.f32.mxu0 0.0
        %371 = vmatmul.mubr.f32.gmra.mxu0 %v271
        %v372 = vpop.f32.mrf.mxu0
        %v373 = vadd.f32 %v249, %v372
        %v374 = vpop.f32.mrf.mxu0
        %375 = vmatprep.mubr.f32.mxu0 0.0
        %376 = vmatmul.mubr.f32.gmra.mxu0 %v274
        %v377 = vpop.f32.mrf.mxu0
        %v378 = vadd.f32 %v249, %v377
        %v379 = vpop.f32.mrf.mxu0
        %380 = vdwg.mxu0
        %v381 = vtanh.pop %v343
        %v382 = vtanh.pop %v348
        %v383 = vtanh.pop %v353
        %v384 = vtanh.pop %v358
        %v385 = vtanh.pop %v363
        %v386 = vtanh.pop %v368
        %v387 = vtanh.pop %v373
        %v388 = vtanh.pop %v378
        %v389 = vld [vmem:[%s3] sm:$0x1]
        %v391 = vlaneseq
        %v392 = vshrl.u32 %v391, 7
        %v393 = vsub.s32 0, %v392
        %v394 = vrot.slane %v389, %v393
        %v396 = vmul.f32 %v381, %v394
        %v397 = vmul.f32 %v382, %v394
        %v398 = vmul.f32 %v383, %v394
        %v399 = vmul.f32 %v384, %v394
        %v400 = vmul.f32 %v385, %v394
        %v401 = vmul.f32 %v386, %v394
        %v402 = vmul.f32 %v387, %v394
        %v403 = vmul.f32 %v388, %v394
        %404 = vadd.xlane.f32.xlu0 %v396
        %v405 = vpop.xlane.xlu0 %404
        %406 = vadd.xlane.f32.xlu0 %v397
        %v407 = vpop.xlane.xlu0 %406
        %408 = vadd.xlane.f32.xlu0 %v398
        %v409 = vpop.xlane.xlu0 %408
        %410 = vadd.xlane.f32.xlu0 %v399
        %v411 = vpop.xlane.xlu0 %410
        %412 = vadd.xlane.f32.xlu0 %v400
        %v413 = vpop.xlane.xlu0 %412
        %414 = vadd.xlane.f32.xlu0 %v401
        %v415 = vpop.xlane.xlu0 %414
        %416 = vadd.xlane.f32.xlu0 %v402
        %v417 = vpop.xlane.xlu0 %416
        %418 = vadd.xlane.f32.xlu0 %v403
        %v419 = vpop.xlane.xlu0 %418
        %v428 = vlaneseq
        %v429 = vand.u32 %v428, 127
        %v430 = vlaneseq
        %v431 = vshrl.u32 %v430, 7
        %v432 = vsub.s32 %v429, %v431
        %v433 = vrot.slane %v405, %v432
        %v434 = vlaneseq
        %v435 = vshrl.u32 %v434, 7
        %v436 = vsub.s32 %v429, %v435
        %v437 = vrot.slane %v407, %v436
        %v438 = vlaneseq
        %v439 = vshrl.u32 %v438, 7
        %v440 = vsub.s32 %v429, %v439
        %v441 = vrot.slane %v409, %v440
        %v442 = vlaneseq
        %v443 = vshrl.u32 %v442, 7
        %v444 = vsub.s32 %v429, %v443
        %v445 = vrot.slane %v411, %v444
        %v446 = vlaneseq
        %v447 = vshrl.u32 %v446, 7
        %v448 = vsub.s32 %v429, %v447
        %v449 = vrot.slane %v413, %v448
        %v450 = vlaneseq
        %v451 = vshrl.u32 %v450, 7
        %v452 = vsub.s32 %v429, %v451
        %v453 = vrot.slane %v415, %v452
        %v454 = vlaneseq
        %v455 = vshrl.u32 %v454, 7
        %v456 = vsub.s32 %v429, %v455
        %v457 = vrot.slane %v417, %v456
        %v458 = vlaneseq
        %v459 = vshrl.u32 %v458, 7
        %v460 = vsub.s32 %v429, %v459
        %v461 = vrot.slane %v419, %v460
        %vm462 = vcmask 1041409
        %v463 = vsel %vm462, %v437, %v433
        %vm464 = vcmask 1042434
        %v465 = vsel %vm464, %v441, %v463
        %vm466 = vcmask 1043459
        %v467 = vsel %vm466, %v445, %v465
        %vm468 = vcmask 1044484
        %v469 = vsel %vm468, %v449, %v467
        %vm470 = vcmask 1045509
        %v471 = vsel %vm470, %v453, %v469
        %vm472 = vcmask 1046534
        %v473 = vsel %vm472, %v457, %v471
        %vm474 = vcmask 1047559
        %v475 = vsel %vm474, %v461, %v473
        %vm477 = vcmask 64512
        %v478 = vsel %vm477, %v475, -inf
        %479 = vmax.xlane.f32.xlu0 %v478
        %v480 = vpop.xlane.xlu0 %479
        %v482 = vlaneseq
        %v483 = vshrl.u32 %v482, 7
        %v484 = vsub.s32 0, %v483
        %v485 = vrot.slane %v480, %v484
        %v486 = vlaneseq
        %v487 = vshrl.u32 %v486, 7
        %v488 = vsub.s32 1, %v487
        %v489 = vrot.slane %v480, %v488
        %v490 = vlaneseq
        %v491 = vshrl.u32 %v490, 7
        %v492 = vsub.s32 2, %v491
        %v493 = vrot.slane %v480, %v492
        %v494 = vlaneseq
        %v495 = vshrl.u32 %v494, 7
        %v496 = vsub.s32 3, %v495
        %v497 = vrot.slane %v480, %v496
        %v498 = vlaneseq
        %v499 = vshrl.u32 %v498, 7
        %v500 = vsub.s32 4, %v499
        %v501 = vrot.slane %v480, %v500
        %v502 = vlaneseq
        %v503 = vshrl.u32 %v502, 7
        %v504 = vsub.s32 5, %v503
        %v505 = vrot.slane %v480, %v504
        %v506 = vlaneseq
        %v507 = vshrl.u32 %v506, 7
        %v508 = vsub.s32 6, %v507
        %v509 = vrot.slane %v480, %v508
        %v510 = vlaneseq
        %v511 = vshrl.u32 %v510, 7
        %v512 = vsub.s32 7, %v511
        %v513 = vrot.slane %v480, %v512
        %v522 = vsub.f32 %v405, %v485
        %v523 = vsub.f32 %v407, %v489
        %v524 = vsub.f32 %v409, %v493
        %v525 = vsub.f32 %v411, %v497
        %v526 = vsub.f32 %v413, %v501
        %v527 = vsub.f32 %v415, %v505
        %v528 = vsub.f32 %v417, %v509
        %v529 = vsub.f32 %v419, %v513
        %v530 = vmul.f32 %v522, 1.442695
        %v531 = vpow.pop %v530
        %v532 = vmul.f32 %v523, 1.442695
        %v533 = vpow.pop %v532
        %v534 = vmul.f32 %v524, 1.442695
        %v535 = vpow.pop %v534
        %v536 = vmul.f32 %v525, 1.442695
        %v537 = vpow.pop %v536
        %v538 = vmul.f32 %v526, 1.442695
        %v539 = vpow.pop %v538
        %v540 = vmul.f32 %v527, 1.442695
        %v541 = vpow.pop %v540
        %v542 = vmul.f32 %v528, 1.442695
        %v543 = vpow.pop %v542
        %v544 = vmul.f32 %v529, 1.442695
        %v545 = vpow.pop %v544
        %554 = vset.pattern.permute.xlu0 0
        %555 = vperm.xlu0 %554, %v531
        %v556 = vpop.permute.xlu0 %555
        %557 = vset.pattern.permute.xlu0 0
        %558 = vperm.xlu0 %557, %v533
        %v559 = vpop.permute.xlu0 %558
        %560 = vset.pattern.permute.xlu0 0
        %561 = vperm.xlu0 %560, %v535
        %v562 = vpop.permute.xlu0 %561
        %563 = vset.pattern.permute.xlu0 0
        %564 = vperm.xlu0 %563, %v537
        %v565 = vpop.permute.xlu0 %564
        %566 = vset.pattern.permute.xlu0 0
        %567 = vperm.xlu0 %566, %v539
        %v568 = vpop.permute.xlu0 %567
        %569 = vset.pattern.permute.xlu0 0
        %570 = vperm.xlu0 %569, %v541
        %v571 = vpop.permute.xlu0 %570
        %572 = vset.pattern.permute.xlu0 0
        %573 = vperm.xlu0 %572, %v543
        %v574 = vpop.permute.xlu0 %573
        %575 = vset.pattern.permute.xlu0 0
        %576 = vperm.xlu0 %575, %v545
        %v577 = vpop.permute.xlu0 %576
        %v578 = vlaneseq
        %v579 = vshrl.u32 %v578, 7
        %v580 = vsub.s32 %v429, %v579
        %v581 = vrot.slane %v556, %v580
        %v582 = vlaneseq
        %v583 = vshrl.u32 %v582, 7
        %v584 = vsub.s32 %v429, %v583
        %v585 = vrot.slane %v559, %v584
        %v586 = vlaneseq
        %v587 = vshrl.u32 %v586, 7
        %v588 = vsub.s32 %v429, %v587
        %v589 = vrot.slane %v562, %v588
        %v590 = vlaneseq
        %v591 = vshrl.u32 %v590, 7
        %v592 = vsub.s32 %v429, %v591
        %v593 = vrot.slane %v565, %v592
        %v594 = vlaneseq
        %v595 = vshrl.u32 %v594, 7
        %v596 = vsub.s32 %v429, %v595
        %v597 = vrot.slane %v568, %v596
        %v598 = vlaneseq
        %v599 = vshrl.u32 %v598, 7
        %v600 = vsub.s32 %v429, %v599
        %v601 = vrot.slane %v571, %v600
        %v602 = vlaneseq
        %v603 = vshrl.u32 %v602, 7
        %v604 = vsub.s32 %v429, %v603
        %v605 = vrot.slane %v574, %v604
        %v606 = vlaneseq
        %v607 = vshrl.u32 %v606, 7
        %v608 = vsub.s32 %v429, %v607
        %v609 = vrot.slane %v577, %v608
        %v610 = vsel %vm462, %v585, %v581
        %v611 = vsel %vm464, %v589, %v610
        %v612 = vsel %vm466, %v593, %v611
        %v613 = vsel %vm468, %v597, %v612
        %v614 = vsel %vm470, %v601, %v613
        %v615 = vsel %vm472, %v605, %v614
        %v616 = vsel %vm474, %v609, %v615
        %v618 = vsel %vm477, %v616, 0.0
        %619 = vadd.xlane.f32.xlu0 %v618
        %v620 = vpop.xlane.xlu0 %619
        %v622 = vlaneseq
        %v623 = vshrl.u32 %v622, 7
        %v624 = vsub.s32 0, %v623
        %v625 = vrot.slane %v620, %v624
        %v626 = vlaneseq
        %v627 = vshrl.u32 %v626, 7
        %v628 = vsub.s32 1, %v627
        %v629 = vrot.slane %v620, %v628
        %v630 = vlaneseq
        %v631 = vshrl.u32 %v630, 7
        %v632 = vsub.s32 2, %v631
        %v633 = vrot.slane %v620, %v632
        %v634 = vlaneseq
        %v635 = vshrl.u32 %v634, 7
        %v636 = vsub.s32 3, %v635
        %v637 = vrot.slane %v620, %v636
        %v638 = vlaneseq
        %v639 = vshrl.u32 %v638, 7
        %v640 = vsub.s32 4, %v639
        %v641 = vrot.slane %v620, %v640
        %v642 = vlaneseq
        %v643 = vshrl.u32 %v642, 7
        %v644 = vsub.s32 5, %v643
        %v645 = vrot.slane %v620, %v644
        %v646 = vlaneseq
        %v647 = vshrl.u32 %v646, 7
        %v648 = vsub.s32 6, %v647
        %v649 = vrot.slane %v620, %v648
        %v650 = vlaneseq
        %v651 = vshrl.u32 %v650, 7
        %v652 = vsub.s32 7, %v651
        %v653 = vrot.slane %v620, %v652
        %v662 = vrcp.pop %v625
        %v663 = vmul.f32 %v531, %v662
        %v664 = vrcp.pop %v629
        %v665 = vmul.f32 %v533, %v664
        %v666 = vrcp.pop %v633
        %v667 = vmul.f32 %v535, %v666
        %v668 = vrcp.pop %v637
        %v669 = vmul.f32 %v537, %v668
        %v670 = vrcp.pop %v641
        %v671 = vmul.f32 %v539, %v670
        %v672 = vrcp.pop %v645
        %v673 = vmul.f32 %v541, %v672
        %v674 = vrcp.pop %v649
        %v675 = vmul.f32 %v543, %v674
        %v676 = vrcp.pop %v653
        %v677 = vmul.f32 %v545, %v676
        %679 = vset.pattern.permute.xlu0 0
        %680 = vperm.xlu0 %679, %v663
        %v681 = vpop.permute.xlu0 %680
        %684 = vset.pattern.permute.xlu0 0
        %685 = vperm.xlu0 %684, %v665
        %v686 = vpop.permute.xlu0 %685
        %689 = vset.pattern.permute.xlu0 0
        %690 = vperm.xlu0 %689, %v667
        %v691 = vpop.permute.xlu0 %690
        %694 = vset.pattern.permute.xlu0 0
        %695 = vperm.xlu0 %694, %v669
        %v696 = vpop.permute.xlu0 %695
        %699 = vset.pattern.permute.xlu0 0
        %700 = vperm.xlu0 %699, %v671
        %v701 = vpop.permute.xlu0 %700
        %704 = vset.pattern.permute.xlu0 0
        %705 = vperm.xlu0 %704, %v673
        %v706 = vpop.permute.xlu0 %705
        %709 = vset.pattern.permute.xlu0 0
        %710 = vperm.xlu0 %709, %v675
        %v711 = vpop.permute.xlu0 %710
        %714 = vset.pattern.permute.xlu0 0
        %715 = vperm.xlu0 %714, %v677
        %v716 = vpop.permute.xlu0 %715
        %v718 = vmul.f32 %v681, %v232
        %v719 = vmul.f32 %v686, %v233
        %v720 = vmul.f32 %v691, %v234
        %v721 = vmul.f32 %v696, %v235
        %v722 = vmul.f32 %v701, %v236
        %v723 = vmul.f32 %v706, %v237
        %v724 = vmul.f32 %v711, %v238
        %v725 = vmul.f32 %v716, %v239
        %v726 = vsel %vm251, %v718, 0.0
        %v727 = vrot.slane %v726, 4
        %v728 = vadd.f32 %v726, %v727
        %v729 = vrot.slane %v728, 2
        %v730 = vadd.f32 %v728, %v729
        %v731 = vrot.slane %v730, 1
        %v732 = vadd.f32 %v730, %v731
        %v733 = vsel %vm251, %v719, 0.0
        %v734 = vrot.slane %v733, 4
        %v735 = vadd.f32 %v733, %v734
        %v736 = vrot.slane %v735, 2
        %v737 = vadd.f32 %v735, %v736
        %v738 = vrot.slane %v737, 1
        %v739 = vadd.f32 %v737, %v738
        %v740 = vsel %vm251, %v720, 0.0
        %v741 = vrot.slane %v740, 4
        %v742 = vadd.f32 %v740, %v741
        %v743 = vrot.slane %v742, 2
        %v744 = vadd.f32 %v742, %v743
        %v745 = vrot.slane %v744, 1
        %v746 = vadd.f32 %v744, %v745
        %v747 = vsel %vm251, %v721, 0.0
        %v748 = vrot.slane %v747, 4
        %v749 = vadd.f32 %v747, %v748
        %v750 = vrot.slane %v749, 2
        %v751 = vadd.f32 %v749, %v750
        %v752 = vrot.slane %v751, 1
        %v753 = vadd.f32 %v751, %v752
        %v754 = vsel %vm251, %v722, 0.0
        %v755 = vrot.slane %v754, 4
        %v756 = vadd.f32 %v754, %v755
        %v757 = vrot.slane %v756, 2
        %v758 = vadd.f32 %v756, %v757
        %v759 = vrot.slane %v758, 1
        %v760 = vadd.f32 %v758, %v759
        %v761 = vsel %vm251, %v723, 0.0
        %v762 = vrot.slane %v761, 4
        %v763 = vadd.f32 %v761, %v762
        %v764 = vrot.slane %v763, 2
        %v765 = vadd.f32 %v763, %v764
        %v766 = vrot.slane %v765, 1
        %v767 = vadd.f32 %v765, %v766
        %v768 = vsel %vm251, %v724, 0.0
        %v769 = vrot.slane %v768, 4
        %v770 = vadd.f32 %v768, %v769
        %v771 = vrot.slane %v770, 2
        %v772 = vadd.f32 %v770, %v771
        %v773 = vrot.slane %v772, 1
        %v774 = vadd.f32 %v772, %v773
        %v775 = vsel %vm251, %v725, 0.0
        %v776 = vrot.slane %v775, 4
        %v777 = vadd.f32 %v775, %v776
        %v778 = vrot.slane %v777, 2
        %v779 = vadd.f32 %v777, %v778
        %v780 = vrot.slane %v779, 1
        %v781 = vadd.f32 %v779, %v780
        %v790 = vsel %vm462, %v739, %v732
        %v791 = vsel %vm464, %v746, %v790
        %v792 = vsel %vm466, %v753, %v791
        %v793 = vsel %vm468, %v760, %v792
        %v794 = vsel %vm470, %v767, %v793
        %v795 = vsel %vm472, %v774, %v794
        %v796 = vsel %vm474, %v781, %v795
        %v798 = vsel %vm251, %v796, 0.0
        %799 = vst [vmem:[%s230] sm:$0xff] %v798
        %s800 = sand.u32 %s119, 1
        %s801 = scalar_lea.sflag [#allocation4], %s800
        %s802 = sand.u32 %s119, 1
        %s803 = smul.addr %s802, 8
        %s804 = scalar_lea.vmem [#allocation7], %s803
        // Predicated region
        $region45: #{tpu_custom_call.1} parent=35 // pred_check
          %p805 = pneg %p129
        $region46: #{tpu_custom_call.1} parent=35 // pred_check_branch
          %807 = sbr.rel (%p805) target = $region48
        $region47: #{tpu_custom_call.1} parent=35 // pred_region
          %s809 = ssub.s32 128, 128
          %810 = vsyncadd %s801, %s809
          %s811 = smul.addr %s22, 128
          %s812 = scalar_lea.hbm %s4, %s811
          %s814 = sshll.u32 %s804, 4
          %s815 = int_to_ptr.vmem [resolvable:$true] %s814
          %817 = dma.vmem_to_hbm [thread:$0]  %s815, 128, %s812, %s801
        $region48: #{tpu_custom_call.1} parent=35 // pred_fallthru
          _
      $region36: #{tpu_custom_call.1} parent=5 // pred_fallthru
        _
      %p818 = scmp.le.s32.totalorder 2, %s17
      // Predicated region
      $region49: #{tpu_custom_call.1} parent=5 // pred_check
        %p819 = pneg %p818
      $region50: #{tpu_custom_call.1} parent=5 // pred_check_branch
        %821 = sbr.rel (%p819) target = $region52
      $region51: #{tpu_custom_call.1} parent=5 // pred_region
        %s822 = ssub.s32 %s17, 2
        // Predicated region
        $region53: #{tpu_custom_call.1} parent=51 // pred_check
          %p823 = pneg %p135
        $region54: #{tpu_custom_call.1} parent=51 // pred_check_branch
          %825 = sbr.rel (%p823) target = $region56
        $region55: #{tpu_custom_call.1} parent=51 // pred_region
          %s826 = sand.u32 %s120, 1
          %s827 = scalar_lea.sflag [#allocation4], %s826
          %s828 = sand.u32 %s120, 1
          %s829 = smul.addr %s828, 8
          %s830 = scalar_lea.vmem [#allocation7], %s829
          %831 = dma.done %s827, 128
        $region56: #{tpu_custom_call.1} parent=51 // pred_fallthru
          _
      $region52: #{tpu_custom_call.1} parent=5 // pred_fallthru
        _
    $region6: #{tpu_custom_call.1} parent=1 // loop_footer
      %s21 = sadd.s32 1, %s17
    $region7: #{tpu_custom_call.1} parent=1 // loop_footer_branch
      %16 = sbr.rel target = $region3
    $region8: #{tpu_custom_call.1} parent=1 // loop_exit
      _
    %832 = vsyncpa [#allocation3], 1
    %s833 = scalar_lea.sflag [#allocation3], 1
    %834 = vsyncpa %s833, 1
    %835 = vsyncpa [#allocation6], 1
    %836 = vsyncpa [#allocation4], 1
    %s837 = scalar_lea.sflag [#allocation4], 1
    %838 = vsyncpa %s837, 1

</llo_original>
